<compile_context>
chip_gen: v7x
topology: tpu7x:2x2x1
jax: 0.10.0
libtpu: 0.0.40
codegen_flags: <defaults>
</compile_context>

<pallas_src>
import functools
import math

import jax
import jax.numpy as jnp
from jax.experimental import pallas as pl
from jax.experimental.pallas import tpu as pltpu


# ---------------------------------------------------------------------------
# Kernel
# ---------------------------------------------------------------------------
def _convtranspose_bn_silu_kernel(x_ref, w_ref, shift_ref, o_ref, *, k, ew_dtype):
    # x_ref:     (th, W, C1)         tile of `th` flattened (n, h) input rows
    # w_ref:     (C1, k*k*C2p)       BN-scale-folded weight, cols (kh, kw, co)
    # shift_ref: (1,  k*k*C2p)       folded BN shift per (kh, kw, co) column
    # o_ref:     (th, k, W, k*C2p)   output tile, axes (row, kh, w, (kw, co))
    th, W, C1 = x_ref.shape
    kcp = o_ref.shape[-1]                       # k * C2p, multiple of 128
    x2d = x_ref[...].reshape(th * W, C1)        # leading-dim merge: free
    acc = jnp.dot(x2d, w_ref[...], preferred_element_type=jnp.float32)

    use_f32_ew = jnp.dtype(ew_dtype) == jnp.dtype(jnp.float32)
    for kh in range(k):                         # static unroll (k == 2)
        cols = slice(kh * kcp, (kh + 1) * kcp)  # lane-aligned column slice
        y = acc[:, cols] + shift_ref[:, cols]   # BN shift (scale folded in W)
        if use_f32_ew:
            # v5e / full-precision path: exact-ish sigmoid in f32.
            s = y * jax.nn.sigmoid(y)
        else:
            # v6e/v7x: exp on the EUP in bf16, approximate reciprocal.
            yl = y.astype(ew_dtype)
            den = (1.0 + jnp.exp(-yl)).astype(jnp.float32)
            s = yl.astype(jnp.float32) * pl.reciprocal(den, approx=True)
        o_ref[:, kh, :, :] = s.astype(o_ref.dtype).reshape(th, W, kcp)


# ---------------------------------------------------------------------------
# Sizing / per-generation helpers (all trace-time Python)
# ---------------------------------------------------------------------------
def _tpu_vmem_capacity_bytes(default=64 * 1024 * 1024):
    """VMEM capacity; falls back to the v7x-safe 64 MiB if the query fails."""
    try:
        cap = int(pltpu.get_tpu_info().vmem_capacity_bytes)
        if cap > 0:
            return cap
    except Exception:
        pass
    return default


def _pick_elementwise_dtype(compute_dtype, elementwise_dtype):
    if elementwise_dtype is not None:
        return jnp.dtype(elementwise_dtype)
    if jnp.dtype(compute_dtype) == jnp.dtype(jnp.float32):
        return jnp.dtype(jnp.float32)           # full-precision path requested
    kind = ""
    try:
        kind = jax.devices()[0].device_kind.lower()
    except Exception:
        pass
    # bf16 VPU/EUP exists on v6e/v7x; v5e and older keep the f32 epilogue.
    if ("v6" in kind) or ("v7" in kind) or ("tpu7" in kind):
        return jnp.dtype(jnp.bfloat16)
    return jnp.dtype(jnp.float32)


def _pick_row_tile(NH, W, C1, ncolp, in_bytes, out_bytes, vmem_budget,
                   max_pixels, min_steps=8):
    """Largest row tile (over the flattened N*H axis) fitting the VMEM budget,
    capped so the grid has >= min_steps steps (>= 4 per TensorCore on v7x)."""
    # Grid-invariant buffers: weight (double-buffered by default) + shift.
    fixed = 2 * C1 * ncolp * in_bytes + 2 * ncolp * 4
    avail = max(vmem_budget - fixed, 1)
    per_row = W * (
        2 * C1 * in_bytes            # x tile, double-buffered
        + 2 * ncolp * out_bytes      # out tile, double-buffered
        + ncolp * 4                  # f32 matmul accumulator
        + (ncolp // 2) * 4)          # per-kh epilogue slice
    th = min(NH, max(1, avail // per_row), max(1, max_pixels // max(W, 1)))
    th = int(max(1, th))
    while (-(-NH // th)) < min_steps and th > 1:
        th = -(-th // 2)
    return th


# ---------------------------------------------------------------------------
# NHWC primary entry point (no boundary transposes)
# ---------------------------------------------------------------------------
def conv_transpose_bn_silu_nhwc(x_nhwc, weight, gamma, beta, running_mean,
                                running_var, eps=1e-5, k=2,
                                compute_dtype=jnp.bfloat16, out_dtype=None,
                                elementwise_dtype=None):
    """x_nhwc: (N, H, W, C1). weight: (C1, C2, k, k) (ConvTranspose2d layout).
    Returns (N, k*H, k*W, C2) NHWC."""
    N, H, W, C1 = x_nhwc.shape
    C2 = weight.shape[1]
    assert weight.shape == (C1, C2, k, k), weight.shape
    # TODO(synk): only k == s, p == 0 (the module defaults) is implemented;
    # overlapping-window configs (k != s or p != 0) need a scatter-add form.
    out_dtype = x_nhwc.dtype if out_dtype is None else out_dtype
    compute_dtype = jnp.dtype(compute_dtype)
    ew_dtype = _pick_elementwise_dtype(compute_dtype, elementwise_dtype)

    # Lane alignment: stored last dim is k*C2p; pad co so k*C2p % 128 == 0.
    # (Only pads when C2 % (128//gcd(k,128)) != 0; the pad is stripped below.)
    align = 128 // math.gcd(k, 128)
    C2p = (-(-C2 // align)) * align
    kcp = k * C2p
    ncolp = k * kcp

    # Fold BatchNorm (inference) into a per-co affine; fold the scale into the
    # weight in f32, then cast to the MXU compute dtype. Kernel only adds shift.
    inv_std = 1.0 / jnp.sqrt(running_var.astype(jnp.float32) + eps)
    scale_c = gamma.astype(jnp.float32) * inv_std
    shift_c = beta.astype(jnp.float32) - running_mean.astype(jnp.float32) * scale_c
    w_f32 = jnp.transpose(weight.astype(jnp.float32), (0, 2, 3, 1))  # (C1,k,k,C2)
    w_f32 = w_f32 * scale_c
    if C2p != C2:
        w_f32 = jnp.pad(w_f32, ((0, 0), (0, 0), (0, 0), (0, C2p - C2)))
        shift_c = jnp.pad(shift_c, (0, C2p - C2))
    w_flat = w_f32.reshape(C1, ncolp).astype(compute_dtype)
    shift = jnp.tile(shift_c, k * k).reshape(1, ncolp)                # (kh,kw,co)

    # Flatten (N, H) into one row axis so small feature maps still pipeline.
    NH = N * H
    x_flat = x_nhwc.reshape(NH, W, C1).astype(compute_dtype)

    in_bytes = compute_dtype.itemsize
    out_bytes = jnp.dtype(out_dtype).itemsize
    vmem_cap = _tpu_vmem_capacity_bytes()
    max_pixels = 2048 if vmem_cap <= 64 * 1024 * 1024 else 8192
    th = _pick_row_tile(NH, W, C1, ncolp, in_bytes, out_bytes,
                        vmem_budget=int(0.45 * vmem_cap),
                        max_pixels=max_pixels)
    grid = (pl.cdiv(NH, th),)

    M = NH * W
    cost = pl.CostEstimate(
        flops=2 * M * C1 * ncolp,
        transcendentals=M * ncolp,
        bytes_accessed=(M * C1 * in_bytes + C1 * ncolp * in_bytes
                        + ncolp * 4 + M * ncolp * out_bytes),
    )

    out = pl.pallas_call(
        functools.partial(_convtranspose_bn_silu_kernel, k=k, ew_dtype=ew_dtype),
        out_shape=jax.ShapeDtypeStruct((NH, k, W, kcp), out_dtype),
        grid_spec=pltpu.PrefetchScalarGridSpec(
            num_scalar_prefetch=0,
            grid=grid,
            in_specs=[
                pl.BlockSpec((th, W, C1), lambda i: (i, 0, 0)),
                # Constant-index operands (weight / shift).  Could use
                # pipeline_mode=pl.Buffered(1) to drop their spare buffers;
                # left at the default — the saving is small vs. the budget.
                pl.BlockSpec((C1, ncolp), lambda i: (0, 0)),
                pl.BlockSpec((1, ncolp), lambda i: (0, 0)),
            ],
            out_specs=pl.BlockSpec((th, k, W, kcp), lambda i: (i, 0, 0, 0)),
        ),
        compiler_params=pltpu.CompilerParams(
            dimension_semantics=("parallel",),
            vmem_limit_bytes=int(0.75 * vmem_cap)),
        cost_estimate=cost,
    )(x_flat, w_flat, shift)

    # (N*H, k, W, k*C2p) -> (N, k*H, k*W, C2).
    if C2p != C2:
        out = out.reshape(N, k * H, W, k, C2p)[..., :C2]
        out = out.reshape(N, k * H, k * W, C2)
    else:
        out = out.reshape(N, k * H, k * W, C2)   # pure reshape, free
    return out


# ---------------------------------------------------------------------------
# NCHW wrapper matching the PyTorch module contract.
# NOTE: the boundary transposes cost an extra HBM pass over the (4x larger)
# output — NHWC pipelines should call conv_transpose_bn_silu_nhwc directly.
# ---------------------------------------------------------------------------
@functools.partial(jax.jit, static_argnames=("k", "compute_dtype", "out_dtype",
                                             "elementwise_dtype"))
def conv_transpose_bn_silu(x, weight, gamma, beta, running_mean, running_var,
                           eps=1e-5, k=2, compute_dtype=jnp.bfloat16,
                           out_dtype=None, elementwise_dtype=None):
    x_nhwc = jnp.transpose(x, (0, 2, 3, 1))
    out_nhwc = conv_transpose_bn_silu_nhwc(
        x_nhwc, weight, gamma, beta, running_mean, running_var,
        eps=eps, k=k, compute_dtype=compute_dtype, out_dtype=out_dtype,
        elementwise_dtype=elementwise_dtype)
    return jnp.transpose(out_nhwc, (0, 3, 1, 2))


# ---------------------------------------------------------------------------
# Pure-JAX references (no Pallas)
# ---------------------------------------------------------------------------
def _reference(x, weight, gamma, beta, running_mean, running_var, eps=1e-5, k=2):
    N, C1, H, W = x.shape
    C2 = weight.shape[1]
    y = jnp.einsum("nchw,cokl->nohwkl", x.astype(jnp.float32),
                   weight.astype(jnp.float32))
    y = jnp.transpose(y, (0, 1, 2, 4, 3, 5)).reshape(N, C2, k * H, k * W)
    inv_std = 1.0 / jnp.sqrt(running_var + eps)
    scale = (gamma * inv_std)[None, :, None, None]
    shift = (beta - running_mean * gamma * inv_std)[None, :, None, None]
    y = y * scale + shift
    return y * jax.nn.sigmoid(y)


def _reference_bf16(x, weight, gamma, beta, running_mean, running_var,
                    eps=1e-5, k=2):
    """Reference mimicking the kernel's quantization: BN scale folded into the
    weight in f32, then weight and activations quantized to bf16."""
    N, C1, H, W = x.shape
    C2 = weight.shape[1]
    inv_std = 1.0 / jnp.sqrt(running_var + eps)
    scale = gamma * inv_std
    shift = beta - running_mean * scale
    w_s = (weight * scale[None, :, None, None]).astype(jnp.bfloat16).astype(jnp.float32)
    xq = x.astype(jnp.bfloat16).astype(jnp.float32)
    y = jnp.einsum("nchw,cokl->nohwkl", xq, w_s)
    y = jnp.transpose(y, (0, 1, 2, 4, 3, 5)).reshape(N, C2, k * H, k * W)
    y = y + shift[None, :, None, None]
    return y * jax.nn.sigmoid(y)


# ---------------------------------------------------------------------------
# Self-test
# ---------------------------------------------------------------------------
if __name__ == "__main__":
    key = jax.random.PRNGKey(0)
    k_x, k_w, k_g, k_b, k_m, k_v, k_x2, k_w2 = jax.random.split(key, 8)

    # Case 1/2: small channels (exercises the co-padding path, C2=8 -> C2p=64).
    N, C1, H, W = 2, 4, 16, 16
    C2, K = 8, 2

    x = jax.random.normal(k_x, (N, C1, H, W), dtype=jnp.float32)
    weight = jax.random.normal(k_w, (C1, C2, K, K), dtype=jnp.float32) * 0.1
    gamma = jax.random.uniform(k_g, (C2,), minval=0.5, maxval=1.5)
    beta = jax.random.normal(k_b, (C2,)) * 0.1
    running_mean = jax.random.normal(k_m, (C2,)) * 0.1
    running_var = jax.random.uniform(k_v, (C2,), minval=0.5, maxval=1.5)

    ref = _reference(x, weight, gamma, beta, running_mean, running_var)

    # 1) f32 compute path: tight check against the f32 reference.
    out_f32 = conv_transpose_bn_silu(x, weight, gamma, beta, running_mean,
                                     running_var, compute_dtype=jnp.float32)
    out_f32 = jax.block_until_ready(out_f32)
    assert out_f32.shape == (N, C2, K * H, K * W), out_f32.shape
    assert jnp.allclose(out_f32, ref, atol=1e-4, rtol=1e-4), "f32 mismatch vs reference"

    # 2) default bf16 fast path (epilogue dtype auto-selected per generation).
    out_bf16 = jax.block_until_ready(
        conv_transpose_bn_silu(x, weight, gamma, beta, running_mean, running_var))
    ref_q = _reference_bf16(x, weight, gamma, beta, running_mean, running_var)
    assert out_bf16.shape == (N, C2, K * H, K * W), out_bf16.shape
    assert jnp.allclose(out_bf16, ref_q, atol=2e-2, rtol=2e-2), "bf16 mismatch vs reference"

    # 3) lane-aligned channel count (k*C2 = 128): exercises the unmasked-store
    #    fast path real models hit (no co padding).
    N2, C1b, Hb, Wb, C2b = 1, 8, 8, 8, 64
    xb = jax.random.normal(k_x2, (N2, C1b, Hb, Wb), dtype=jnp.float32)
    wb = jax.random.normal(k_w2, (C1b, C2b, K, K), dtype=jnp.float32) * 0.1
    gb = jax.random.uniform(k_g, (C2b,), minval=0.5, maxval=1.5)
    bb = jax.random.normal(k_b, (C2b,)) * 0.1
    mb = jax.random.normal(k_m, (C2b,)) * 0.1
    vb = jax.random.uniform(k_v, (C2b,), minval=0.5, maxval=1.5)

    out_b = jax.block_until_ready(
        conv_transpose_bn_silu(xb, wb, gb, bb, mb, vb))
    ref_b = _reference_bf16(xb, wb, gb, bb, mb, vb)
    assert out_b.shape == (N2, C2b, K * Hb, K * Wb), out_b.shape
    assert jnp.allclose(out_b, ref_b, atol=2e-2, rtol=2e-2), "aligned-C2 mismatch vs reference"

    print("KERNEL_OK")
</pallas_src>

<mosaic_0001>
module attributes {stable_mosaic.version = 11 : i64} {
  func.func @_convtranspose_bn_silu_kernel(%arg0: i32, %arg1: memref<4x16x4xf32, #tpu.memory_space<vmem>>, %arg2: memref<4x256xf32, #tpu.memory_space<vmem>>, %arg3: memref<1x256xf32, #tpu.memory_space<vmem>>, %arg4: memref<4x2x16x128xf32, #tpu.memory_space<vmem>>) attributes {dimension_semantics = [#tpu.dimension_semantics<parallel>], iteration_bounds = array<i64: 8>, scalar_prefetch = 0 : i64, scratch_operands = 0 : i64, tpu.core_type = #tpu.core_type<tc>, window_params = [{transform_indices = @transform_0, window_bounds = array<i64: 4, 16, 4>}, {pipeline_mode = #tpu.pipeline_mode<synchronous>, transform_indices = @transform_1, window_bounds = array<i64: 4, 256>}, {pipeline_mode = #tpu.pipeline_mode<synchronous>, transform_indices = @transform_2, window_bounds = array<i64: 1, 256>}, {transform_indices = @transform_3, window_bounds = array<i64: 4, 2, 16, 128>}]} {
    %c0 = arith.constant 0 : index
    %c0_0 = arith.constant 0 : index
    %c0_1 = arith.constant 0 : index
    %0 = vector.load %arg1[%c0, %c0_0, %c0_1] : memref<4x16x4xf32, #tpu.memory_space<vmem>>, vector<4x16x4xf32>
    %1 = vector.shape_cast %0 : vector<4x16x4xf32> to vector<64x4xf32>
    %c0_2 = arith.constant 0 : index
    %c0_3 = arith.constant 0 : index
    %2 = vector.load %arg2[%c0_2, %c0_3] : memref<4x256xf32, #tpu.memory_space<vmem>>, vector<4x256xf32>
    %cst = arith.constant dense<0.000000e+00> : vector<64x256xf32>
    %3 = tpu.matmul %1, %2, %cst {dimension_numbers = #tpu.dot_dimension_numbers<[1], [0], [0], [1], [0, 0, 1, 1], [], []>} : vector<64x4xf32>, vector<4x256xf32>, vector<64x256xf32> -> vector<64x256xf32>
    %4 = vector.extract_strided_slice %3 {offsets = [0, 0], sizes = [64, 128], strides = [1, 1]} : vector<64x256xf32> to vector<64x128xf32>
    %c0_4 = arith.constant 0 : index
    %c0_5 = arith.constant 0 : index
    %5 = vector.load %arg3[%c0_4, %c0_5] : memref<1x256xf32, #tpu.memory_space<vmem>>, vector<1x128xf32>
    %6 = vector.broadcast %5 : vector<1x128xf32> to vector<64x128xf32>
    %7 = arith.addf %4, %6 : vector<64x128xf32>
    %8 = arith.negf %7 : vector<64x128xf32>
    %9 = math.exp %8 : vector<64x128xf32>
    %cst_6 = arith.constant 1.000000e+00 : f32
    %10 = vector.broadcast %cst_6 : f32 to vector<64x128xf32>
    %11 = arith.addf %10, %9 : vector<64x128xf32>
    %12 = arith.divf %10, %11 : vector<64x128xf32>
    %13 = arith.mulf %7, %12 : vector<64x128xf32>
    %14 = vector.shape_cast %13 : vector<64x128xf32> to vector<4x16x128xf32>
    %c0_7 = arith.constant 0 : index
    %c0_8 = arith.constant 0 : index
    %c0_9 = arith.constant 0 : index
    %c0_10 = arith.constant 0 : index
    %15 = vector.load %arg4[%c0_7, %c0_8, %c0_9, %c0_10] : memref<4x2x16x128xf32, #tpu.memory_space<vmem>>, vector<4x1x16x128xf32>
    %16 = vector.shape_cast %15 : vector<4x1x16x128xf32> to vector<4x16x128xf32>
    %17 = vector.shape_cast %14 : vector<4x16x128xf32> to vector<4x1x16x128xf32>
    tpu.vector_store %arg4[%c0_7, %c0_8, %c0_9, %c0_10], %17 {strides = array<i32>} : memref<4x2x16x128xf32, #tpu.memory_space<vmem>>, vector<4x1x16x128xf32>,
    %18 = vector.extract_strided_slice %3 {offsets = [0, 128], sizes = [64, 128], strides = [1, 1]} : vector<64x256xf32> to vector<64x128xf32>
    %c0_11 = arith.constant 0 : index
    %c128 = arith.constant 128 : index
    %19 = vector.load %arg3[%c0_11, %c128] : memref<1x256xf32, #tpu.memory_space<vmem>>, vector<1x128xf32>
    %20 = vector.broadcast %19 : vector<1x128xf32> to vector<64x128xf32>
    %21 = arith.addf %18, %20 : vector<64x128xf32>
    %22 = arith.negf %21 : vector<64x128xf32>
    %23 = math.exp %22 : vector<64x128xf32>
    %cst_12 = arith.constant 1.000000e+00 : f32
    %24 = vector.broadcast %cst_12 : f32 to vector<64x128xf32>
    %25 = arith.addf %24, %23 : vector<64x128xf32>
    %26 = arith.divf %24, %25 : vector<64x128xf32>
    %27 = arith.mulf %21, %26 : vector<64x128xf32>
    %28 = vector.shape_cast %27 : vector<64x128xf32> to vector<4x16x128xf32>
    %c0_13 = arith.constant 0 : index
    %c1 = arith.constant 1 : index
    %c0_14 = arith.constant 0 : index
    %c0_15 = arith.constant 0 : index
    %29 = vector.load %arg4[%c0_13, %c1, %c0_14, %c0_15] : memref<4x2x16x128xf32, #tpu.memory_space<vmem>>, vector<4x1x16x128xf32>
    %30 = vector.shape_cast %29 : vector<4x1x16x128xf32> to vector<4x16x128xf32>
    %31 = vector.shape_cast %28 : vector<4x16x128xf32> to vector<4x1x16x128xf32>
    tpu.vector_store %arg4[%c0_13, %c1, %c0_14, %c0_15], %31 {strides = array<i32>} : memref<4x2x16x128xf32, #tpu.memory_space<vmem>>, vector<4x1x16x128xf32>,
    return
  }
  func.func @transform_0(%arg0: i32) -> (i32, i32, i32) {
    %c0_i32 = arith.constant 0 : i32
    %c0_i32_0 = arith.constant 0 : i32
    %c0_i32_1 = arith.constant 0 : i32
    return %arg0, %c0_i32, %c0_i32_0 : i32, i32, i32
  }
  func.func @transform_1(%arg0: i32) -> (i32, i32) {
    %c0_i32 = arith.constant 0 : i32
    %c0_i32_0 = arith.constant 0 : i32
    %c0_i32_1 = arith.constant 0 : i32
    return %c0_i32, %c0_i32_0 : i32, i32
  }
  func.func @transform_2(%arg0: i32) -> (i32, i32) {
    %c0_i32 = arith.constant 0 : i32
    %c0_i32_0 = arith.constant 0 : i32
    %c0_i32_1 = arith.constant 0 : i32
    return %c0_i32, %c0_i32_0 : i32, i32
  }
  func.func @transform_3(%arg0: i32) -> (i32, i32, i32, i32) {
    %c0_i32 = arith.constant 0 : i32
    %c0_i32_0 = arith.constant 0 : i32
    %c0_i32_1 = arith.constant 0 : i32
    %c0_i32_2 = arith.constant 0 : i32
    return %arg0, %c0_i32, %c0_i32_0, %c0_i32_1 : i32, i32, i32, i32
  }
}

</mosaic_0001>

<llo_original>
// kernel: tile.8
$region0: #{tile.8}
  #allocation0 [shape = 's32[1]{0}', space=sflag, size = 0x4, scoped, tag = 'scoped memory for tile.8']
  %s0 = inlined_call_operand.vmem [shape: f32[64], index: 0, kind: input, shape index: {}]
  %s1 = inlined_call_operand.vmem [shape: f32[4,64], index: 1, kind: output, shape index: {}]
  // Predicated region
  $region2: #{tile.8} parent=0 // pred_check
    _
  $region3: #{tile.8} parent=0 // pred_check_branch
    %3 = sbr.rel (0) target = $region5
  $region4: #{tile.8} parent=0 // pred_region
    _
  $region5: #{tile.8} parent=0 // pred_fallthru
    _
  %v4 = vld [vmem:[%s0] ss:$0 sm:$0xff]
  %5 = vst [vmem:[%s1] sm:$0xf] %v4

// kernel: tile.9
$region0: #{tile.9}
  %s0 = inlined_call_operand.vmem [shape: f32[4,64], index: 0, kind: input, shape index: {}]
  %s1 = inlined_call_operand.vmem [shape: f32[1,256], index: 1, kind: output, shape index: {}]
  $region1: #{tile.9} parent=0
    #allocation0 [shape = 'u8[8192]{0}', space=vmem, size = 0x2000, scoped, tag = 'scoped mem for output reshape']
    #allocation1 [shape = 'u8[4096]{0}', space=vmem, size = 0x1000, scoped, tag = 'scoped mem for input reshape']
    %s3 = sshllo.u32 0, 4
    %v4 = vld [vmem:[%s0] sm:%s3]
    %5 = vst [vmem:[#allocation1] sm:%s3] %v4
    %s6 = smov 3
    %v7 = vld [vmem:[#allocation1] ss:$2 sm:%s6]
    %vm8 = vcmask 523264
    %9 = vst.msk [vmem:[#allocation0] ss:$8 sm:$0x3] %vm8, %v7
    %s10 = scalar_lea.vmem [#allocation1], 1
    %s11 = smov 3
    %v12 = vld [vmem:[%s10] ss:$2 sm:%s11]
    %13 = vrot.lane.b32.xlu0 %v12, 64
    %v14 = vpop.permute.xlu0 %13
    %vm15 = vcmask 1048064
    %16 = vst.msk [vmem:[#allocation0] ss:$8 sm:$0x3] %vm15, %v14
    %s18 = sshllo.u32 0, 1
    %v20 = vld [vmem:[#allocation0] sm:%s18]
    %s21 = sshllo.u32 0, 1
    %22 = vst [vmem:[%s1] sm:%s21] %v20
    %s23 = scalar_lea.vmem [#allocation0], 8
    %v24 = vld [vmem:[%s23] sm:%s18]
    %s25 = sshllo.u32 0, 1
    %s26 = scalar_lea.vmem %s1, 1
    %27 = vst [vmem:[%s26] sm:%s25] %v24

// kernel: conv_transpose_bn_silu.1
$region0: #{conv_transpose_bn_silu.1}
  #allocation0 [shape = 'u32[]', space=smem, size = 0x4, offset = 0x4, fixed_abs, tag = 'smem constant byte address 0x4 - core index']
  #allocation1 [shape = 'u32[144,128]{1,0:T(1,128)}', space=vmem, size = 0x12000, scoped, tag = 'internal scratch']
  %s0 = inlined_call_operand.vmem [shape: f32[32,16,4], index: 0, kind: input, shape index: {}]
  %s1 = inlined_call_operand.vmem [shape: f32[4,256], index: 1, kind: input, shape index: {}]
  %s2 = inlined_call_operand.vmem [shape: f32[1,256], index: 2, kind: input, shape index: {}]
  %s3 = inlined_call_operand.vmem [shape: f32[32,2,16,128], index: 3, kind: output, shape index: {}]
  %s4 = sld [smem:[#allocation0]]
  $region45: #{conv_transpose_bn_silu.1} parent=0
    _
  %s6 = ssub.s32 1, %s4
  %s7 = scalar_select 0, %s6, %s4
  loop: start=0, step=1, limit=10
  $region2: #{conv_transpose_bn_silu.1} parent=0 // loop_pre_header
    _
  $region3: #{conv_transpose_bn_silu.1} parent=0 // loop_header
    %s9 = sphi 0, %s13
    %p10 = scmp.ge.s32.totalorder %s9, 10
    %s19 = sphi 0, %s21
    %s22 = sphi 0, %s19
    %s23 = sphi 0, %s22
    %s39 = sphi 0, %s23
    %s43 = sphi 0, %s43
    %s45 = sphi 0, %s43
    %s46 = sphi 0, %s45
    %s60 = sphi 0, %s46
    %s64 = sphi 0, %s64
    %s66 = sphi 0, %s64
    %s67 = sphi 0, %s66
    %s81 = sphi 0, %s67
    %s87 = sphi 0, %s89
    %s90 = sphi 0, %s87
    %s91 = sphi 0, %s90
    %s107 = sphi 0, %s91
  $region4: #{conv_transpose_bn_silu.1} parent=0 // loop_header_branch
    %12 = sbr.rel (%p10) target = $region8
  $region5: #{conv_transpose_bn_silu.1} parent=0 // loop_body
    %s14 = ssub.s32 %s9, 1
    %s15 = ssub.s32 %s9, 2
    %s16 = sadd.s32 %s9, 1
    %s17 = ssub.s32 %s9, %s16
    %p18 = scmp.eq.s32.totalorder %s17, 0
    %s20 = sadd.s32 %s19, 1
    %s21 = scalar_select %p18, %s19, %s20
    %p24 = pneg %p18
    %p25 = scmp.eq.s32.totalorder %s9, 7
    %p26 = por %p24, %p25
    %p27 = scmp.ne.s32.totalorder %s19, %s22
    %p28 = scmp.eq.s32.totalorder %s9, 0
    %p29 = por %p27, %p28
    %p30 = scmp.ne.s32.totalorder %s19, %s22
    %p31 = scmp.eq.s32.totalorder %s14, 7
    %p32 = por %p30, %p31
    %p33 = scmp.ne.s32.totalorder %s22, %s23
    %p34 = scmp.eq.s32.totalorder %s14, 0
    %p35 = por %p33, %p34
    %p36 = scmp.ne.s32.totalorder %s22, %s23
    %p37 = scmp.eq.s32.totalorder %s15, 7
    %p38 = por %p36, %p37
    %p40 = scmp.ne.s32.totalorder %s23, %s39
    %p41 = scmp.eq.s32.totalorder %s15, 0
    %p42 = por %p40, %p41
    %s44 = sadd.s32 %s43, 1
    %p47 = scmp.eq.s32.totalorder %s9, 7
    %p48 = scmp.ne.s32.totalorder %s43, %s45
    %p49 = scmp.eq.s32.totalorder %s9, 0
    %p50 = por %p48, %p49
    %p51 = scmp.ne.s32.totalorder %s43, %s45
    %p52 = scmp.eq.s32.totalorder %s14, 7
    %p53 = por %p51, %p52
    %p54 = scmp.ne.s32.totalorder %s45, %s46
    %p55 = scmp.eq.s32.totalorder %s14, 0
    %p56 = por %p54, %p55
    %p57 = scmp.ne.s32.totalorder %s45, %s46
    %p58 = scmp.eq.s32.totalorder %s15, 7
    %p59 = por %p57, %p58
    %p61 = scmp.ne.s32.totalorder %s46, %s60
    %p62 = scmp.eq.s32.totalorder %s15, 0
    %p63 = por %p61, %p62
    %s65 = sadd.s32 %s64, 1
    %p68 = scmp.eq.s32.totalorder %s9, 7
    %p69 = scmp.ne.s32.totalorder %s64, %s66
    %p70 = scmp.eq.s32.totalorder %s9, 0
    %p71 = por %p69, %p70
    %p72 = scmp.ne.s32.totalorder %s64, %s66
    %p73 = scmp.eq.s32.totalorder %s14, 7
    %p74 = por %p72, %p73
    %p75 = scmp.ne.s32.totalorder %s66, %s67
    %p76 = scmp.eq.s32.totalorder %s14, 0
    %p77 = por %p75, %p76
    %p78 = scmp.ne.s32.totalorder %s66, %s67
    %p79 = scmp.eq.s32.totalorder %s15, 7
    %p80 = por %p78, %p79
    %p82 = scmp.ne.s32.totalorder %s67, %s81
    %p83 = scmp.eq.s32.totalorder %s15, 0
    %p84 = por %p82, %p83
    %s85 = ssub.s32 %s9, %s16
    %p86 = scmp.eq.s32.totalorder %s85, 0
    %s88 = sadd.s32 %s87, 1
    %s89 = scalar_select %p86, %s87, %s88
    %p92 = pneg %p86
    %p93 = scmp.eq.s32.totalorder %s9, 7
    %p94 = por %p92, %p93
    %p95 = scmp.ne.s32.totalorder %s87, %s90
    %p96 = scmp.eq.s32.totalorder %s9, 0
    %p97 = por %p95, %p96
    %p98 = scmp.ne.s32.totalorder %s87, %s90
    %p99 = scmp.eq.s32.totalorder %s14, 7
    %p100 = por %p98, %p99
    %p101 = scmp.ne.s32.totalorder %s90, %s91
    %p102 = scmp.eq.s32.totalorder %s14, 0
    %p103 = por %p101, %p102
    %p104 = scmp.ne.s32.totalorder %s90, %s91
    %p105 = scmp.eq.s32.totalorder %s15, 7
    %p106 = por %p104, %p105
    %p108 = scmp.ne.s32.totalorder %s91, %s107
    %p109 = scmp.eq.s32.totalorder %s15, 0
    %p110 = por %p108, %p109
    %p111 = scmp.le.s32.totalorder 1, %s9
    %p112 = scmp.lt.s32.totalorder %s9, 9
    %p113 = pnand %p111, %p112
    %p114 = pneg %p113
    // Predicated region
    $region9: #{conv_transpose_bn_silu.1} parent=5 // pred_check
      _
    $region10: #{conv_transpose_bn_silu.1} parent=5 // pred_check_branch
      %116 = sbr.rel (%p113) target = $region12
    $region11: #{conv_transpose_bn_silu.1} parent=5 // pred_region
      %s117 = ssub.s32 %s9, 1
      // Predicated region
      $region13: #{conv_transpose_bn_silu.1} parent=11 // pred_check
        %p118 = pneg %p56
      $region14: #{conv_transpose_bn_silu.1} parent=11 // pred_check_branch
        %120 = sbr.rel (%p118) target = $region16
      $region15: #{conv_transpose_bn_silu.1} parent=11 // pred_region
        _
      $region16: #{conv_transpose_bn_silu.1} parent=11 // pred_fallthru
        _
      // Predicated region
      $region17: #{conv_transpose_bn_silu.1} parent=11 // pred_check
        %p121 = pneg %p77
      $region18: #{conv_transpose_bn_silu.1} parent=11 // pred_check_branch
        %123 = sbr.rel (%p121) target = $region20
      $region19: #{conv_transpose_bn_silu.1} parent=11 // pred_region
        _
      $region20: #{conv_transpose_bn_silu.1} parent=11 // pred_fallthru
        _
    $region12: #{conv_transpose_bn_silu.1} parent=5 // pred_fallthru
      _
    %p124 = scmp.lt.s32.totalorder %s9, 8
    // Predicated region
    $region21: #{conv_transpose_bn_silu.1} parent=5 // pred_check
      %p125 = pneg %p124
    $region22: #{conv_transpose_bn_silu.1} parent=5 // pred_check_branch
      %127 = sbr.rel (%p125) target = $region24
    $region23: #{conv_transpose_bn_silu.1} parent=5 // pred_region
      // Predicated region
      $region25: #{conv_transpose_bn_silu.1} parent=23 // pred_check
        %p128 = pneg %p29
      $region26: #{conv_transpose_bn_silu.1} parent=23 // pred_check_branch
        %130 = sbr.rel (%p128) target = $region28
      $region27: #{conv_transpose_bn_silu.1} parent=23 // pred_region
        %s131 = smul.u32 4, %s9
        %p132 = scmp.lt.s32.totalorder %s131, 31
        %s133 = scalar_select %p132, %s131, 31
        %s134 = smul.addr %s133, 2
        %s135 = smul.addr %s134, 8
        %s136 = scalar_lea.vmem %s0, %s135
        %s137 = smul.u32 4, %s9
      $region28: #{conv_transpose_bn_silu.1} parent=23 // pred_fallthru
        _
    $region24: #{conv_transpose_bn_silu.1} parent=5 // pred_fallthru
      _
    %p138 = scmp.le.s32.totalorder 1, %s9
    %p139 = scmp.lt.s32.totalorder %s9, 9
    %p140 = pnand %p138, %p139
    %p141 = pneg %p140
    // Predicated region
    $region29: #{conv_transpose_bn_silu.1} parent=5 // pred_check
      _
    $region30: #{conv_transpose_bn_silu.1} parent=5 // pred_check_branch
      %143 = sbr.rel (%p140) target = $region32
    $region31: #{conv_transpose_bn_silu.1} parent=5 // pred_region
      %s144 = ssub.s32 %s9, 1
      %s145 = smul.u32 4, %s14
      %p146 = scmp.lt.s32.totalorder %s145, 31
      %s147 = scalar_select %p146, %s145, 31
      %s148 = smul.addr %s147, 2
      %s149 = smul.addr %s148, 8
      %s150 = scalar_lea.vmem %s0, %s149
      %p151 = pneg %p35
      %p152 = pneg %p32
      %p153 = pneg %p56
      %p154 = pneg %p53
      %p155 = pneg %p77
      %p156 = pneg %p74
      %p157 = pneg %p103
      %p158 = pneg %p100
      %s159 = smul.u32 4, %s14
      %p160 = scmp.lt.s32.totalorder %s159, 31
      %s161 = scalar_select %p160, %s159, 31
      %s162 = smul.addr %s161, 4
      %s163 = smul.addr %s162, 8
      %s164 = scalar_lea.vmem %s3, %s163
      %s165 = smul.u32 4, %s14
      %p166 = scmp.lt.s32.totalorder %s165, 31
      %s167 = scalar_select %p166, %s165, 31
      %s168 = smul.addr %s167, 2
      %s169 = smul.addr %s168, 8
      %s170 = scalar_lea.vmem %s0, %s169
      %s171 = smul.u32 4, %s14
      %s172 = smul.u32 4, %s14
      %p173 = scmp.lt.s32.totalorder %s172, 31
      %s174 = scalar_select %p173, %s172, 31
      %s175 = smul.addr %s174, 4
      %s176 = smul.addr %s175, 8
      %s177 = scalar_lea.vmem %s3, %s176
      %s178 = smul.u32 4, %s14
      %v179 = vld [vmem:[%s170] sm:$0xff]
      %v180 = vld [vmem:[%s170 + $0x8] sm:$0xff]
      %v181 = vld [vmem:[%s170 + $0x10] sm:$0xff]
      %v182 = vld [vmem:[%s170 + $0x18] sm:$0xff]
      %v183 = vld [vmem:[%s170 + $0x20] sm:$0xff]
      %v184 = vld [vmem:[%s170 + $0x28] sm:$0xff]
      %v185 = vld [vmem:[%s170 + $0x30] sm:$0xff]
      %v186 = vld [vmem:[%s170 + $0x38] sm:$0xff]
      %v187 = vld [vmem:[%s1] sm:$0xff]
      %v189 = vcombine.high %v187, %v187
      %vm190 = vcmask 31744
      %v192 = vsel %vm190, %v179, 0
      %v195 = vsel %vm190, %v180, 0
      %v198 = vsel %vm190, %v181, 0
      %v201 = vsel %vm190, %v182, 0
      %v204 = vsel %vm190, %v183, 0
      %v207 = vsel %vm190, %v184, 0
      %v210 = vsel %vm190, %v185, 0
      %v213 = vsel %vm190, %v186, 0
      %vm215 = vcmask 1043456
      %v216 = vsel %vm215, %v187, 0
      %v218 = vsel %vm215, %v189, 0
      %220 = vmatprep.subr.mxu0 %v218
      %221 = vmatpush1.msra.mxu0 %v216
      %222 = vmatprep.subr.mxu0 0.0
      %223 = vmatpush1.msra.mxu0 0.0
      %224 = vmatprep.subr.mxu0 0.0
      %225 = vmatpush1.msra.mxu0 0.0
      %226 = vmatprep.subr.mxu0 0.0
      %227 = vmatpush1.msra.mxu0 0.0
      %228 = vmatprep.subr.mxu0 0.0
      %229 = vmatpush1.msra.mxu0 0.0
      %230 = vmatprep.subr.mxu0 0.0
      %231 = vmatpush1.msra.mxu0 0.0
      %232 = vmatprep.subr.mxu0 0.0
      %233 = vmatpush1.msra.mxu0 0.0
      %234 = vmatprep.subr.mxu0 0.0
      %235 = vmatpush1.msra.mxu0 0.0
      %236 = vmatprep.subr.mxu0 0.0
      %237 = vmatpush1.msra.mxu0 0.0
      %238 = vmatprep.subr.mxu0 0.0
      %239 = vmatpush1.msra.mxu0 0.0
      %240 = vmatprep.subr.mxu0 0.0
      %241 = vmatpush1.msra.mxu0 0.0
      %242 = vmatprep.subr.mxu0 0.0
      %243 = vmatpush1.msra.mxu0 0.0
      %244 = vmatprep.subr.mxu0 0.0
      %245 = vmatpush1.msra.mxu0 0.0
      %246 = vmatprep.subr.mxu0 0.0
      %247 = vmatpush1.msra.mxu0 0.0
      %248 = vmatprep.subr.mxu0 0.0
      %249 = vmatpush1.msra.mxu0 0.0
      %250 = vmatprep.subr.mxu0 0.0
      %251 = vmatpush1.msra.mxu0 0.0
      %252 = vmatprep.subr.mxu0 0.0
      %253 = vmatpush1.msra.mxu0 0.0
      %254 = vmatprep.subr.mxu0 0.0
      %255 = vmatpush1.msra.mxu0 0.0
      %256 = vmatprep.subr.mxu0 0.0
      %257 = vmatpush1.msra.mxu0 0.0
      %258 = vmatprep.subr.mxu0 0.0
      %259 = vmatpush1.msra.mxu0 0.0
      %260 = vmatprep.subr.mxu0 0.0
      %261 = vmatpush1.msra.mxu0 0.0
      %262 = vmatprep.subr.mxu0 0.0
      %263 = vmatpush1.msra.mxu0 0.0
      %264 = vmatprep.subr.mxu0 0.0
      %265 = vmatpush1.msra.mxu0 0.0
      %266 = vmatprep.subr.mxu0 0.0
      %267 = vmatpush1.msra.mxu0 0.0
      %268 = vmatprep.subr.mxu0 0.0
      %269 = vmatpush1.msra.mxu0 0.0
      %270 = vmatprep.subr.mxu0 0.0
      %271 = vmatpush1.msra.mxu0 0.0
      %272 = vmatprep.subr.mxu0 0.0
      %273 = vmatpush1.msra.mxu0 0.0
      %274 = vmatprep.subr.mxu0 0.0
      %275 = vmatpush1.msra.mxu0 0.0
      %276 = vmatprep.subr.mxu0 0.0
      %277 = vmatpush1.msra.mxu0 0.0
      %278 = vmatprep.subr.mxu0 0.0
      %279 = vmatpush1.msra.mxu0 0.0
      %280 = vmatprep.subr.mxu0 0.0
      %281 = vmatpush1.msra.mxu0 0.0
      %282 = vmatprep.subr.mxu0 0.0
      %283 = vmatpush1.msra.mxu0 0.0
      %284 = vmatprep.mubr.f32.mxu0 0.0
      %285 = vmatmul.mubr.f32.gmra.mrb[0].mxu0 %v192
      %v286 = vpop.f32.mrb[0].mxu0
      %v287 = vadd.f32 0.0, %v286
      %v288 = vpop.f32.mrb[0].mxu0
      %v289 = vadd.f32 0.0, %v288
      %290 = vmatprep.mubr.f32.mxu0 0.0
      %291 = vmatmul.mubr.f32.gmra.mrb[0].mxu0 %v195
      %v292 = vpop.f32.mrb[0].mxu0
      %v293 = vadd.f32 0.0, %v292
      %v294 = vpop.f32.mrb[0].mxu0
      %v295 = vadd.f32 0.0, %v294
      %296 = vmatprep.mubr.f32.mxu0 0.0
      %297 = vmatmul.mubr.f32.gmra.mrb[0].mxu0 %v198
      %v298 = vpop.f32.mrb[0].mxu0
      %v299 = vadd.f32 0.0, %v298
      %v300 = vpop.f32.mrb[0].mxu0
      %v301 = vadd.f32 0.0, %v300
      %302 = vmatprep.mubr.f32.mxu0 0.0
      %303 = vmatmul.mubr.f32.gmra.mrb[0].mxu0 %v201
      %v304 = vpop.f32.mrb[0].mxu0
      %v305 = vadd.f32 0.0, %v304
      %v306 = vpop.f32.mrb[0].mxu0
      %v307 = vadd.f32 0.0, %v306
      %308 = vmatprep.mubr.f32.mxu0 0.0
      %309 = vmatmul.mubr.f32.gmra.mrb[0].mxu0 %v204
      %v310 = vpop.f32.mrb[0].mxu0
      %v311 = vadd.f32 0.0, %v310
      %v312 = vpop.f32.mrb[0].mxu0
      %v313 = vadd.f32 0.0, %v312
      %314 = vmatprep.mubr.f32.mxu0 0.0
      %315 = vmatmul.mubr.f32.gmra.mrb[0].mxu0 %v207
      %v316 = vpop.f32.mrb[0].mxu0
      %v317 = vadd.f32 0.0, %v316
      %v318 = vpop.f32.mrb[0].mxu0
      %v319 = vadd.f32 0.0, %v318
      %320 = vmatprep.mubr.f32.mxu0 0.0
      %321 = vmatmul.mubr.f32.gmra.mrb[0].mxu0 %v210
      %v322 = vpop.f32.mrb[0].mxu0
      %v323 = vadd.f32 0.0, %v322
      %v324 = vpop.f32.mrb[0].mxu0
      %v325 = vadd.f32 0.0, %v324
      %326 = vmatprep.mubr.f32.mxu0 0.0
      %327 = vmatmul.mubr.f32.gmra.mrb[0].mxu0 %v213
      %v328 = vpop.f32.mrb[0].mxu0
      %v329 = vadd.f32 0.0, %v328
      %v330 = vpop.f32.mrb[0].mxu0
      %v331 = vadd.f32 0.0, %v330
      %332 = vdwg.mxu0
      %v333 = vld [vmem:[%s2] sm:$0x1]
      %v335 = vlaneseq
      %v336 = vshrl.u32 %v335, 7
      %v337 = vsub.s32 0, %v336
      %v338 = vrot.slane %v333, %v337
      %v340 = vadd.f32 %v287, %v338
      %v341 = vadd.f32 %v293, %v338
      %v342 = vadd.f32 %v299, %v338
      %v343 = vadd.f32 %v305, %v338
      %v344 = vadd.f32 %v311, %v338
      %v345 = vadd.f32 %v317, %v338
      %v346 = vadd.f32 %v323, %v338
      %v347 = vadd.f32 %v329, %v338
      %v348 = vxor.u32 %v340, 2147483648
      %v349 = vxor.u32 %v341, 2147483648
      %v350 = vxor.u32 %v342, 2147483648
      %v351 = vxor.u32 %v343, 2147483648
      %v352 = vxor.u32 %v344, 2147483648
      %v353 = vxor.u32 %v345, 2147483648
      %v354 = vxor.u32 %v346, 2147483648
      %v355 = vxor.u32 %v347, 2147483648
      %v356 = vmul.f32 %v348, 1.442695
      %v357 = vpow.pop %v356
      %v358 = vmul.f32 %v349, 1.442695
      %v359 = vpow.pop %v358
      %v360 = vmul.f32 %v350, 1.442695
      %v361 = vpow.pop %v360
      %v362 = vmul.f32 %v351, 1.442695
      %v363 = vpow.pop %v362
      %v364 = vmul.f32 %v352, 1.442695
      %v365 = vpow.pop %v364
      %v366 = vmul.f32 %v353, 1.442695
      %v367 = vpow.pop %v366
      %v368 = vmul.f32 %v354, 1.442695
      %v369 = vpow.pop %v368
      %v370 = vmul.f32 %v355, 1.442695
      %v371 = vpow.pop %v370
      %v372 = vadd.f32 %v357, 1.0
      %v373 = vadd.f32 %v359, 1.0
      %v374 = vadd.f32 %v361, 1.0
      %v375 = vadd.f32 %v363, 1.0
      %v376 = vadd.f32 %v365, 1.0
      %v377 = vadd.f32 %v367, 1.0
      %v378 = vadd.f32 %v369, 1.0
      %v379 = vadd.f32 %v371, 1.0
      %v380 = vrcp.pop %v372
      %v381 = vmul.f32 1.0, %v380
      %v382 = vrcp.pop %v373
      %v383 = vmul.f32 1.0, %v382
      %v384 = vrcp.pop %v374
      %v385 = vmul.f32 1.0, %v384
      %v386 = vrcp.pop %v375
      %v387 = vmul.f32 1.0, %v386
      %v388 = vrcp.pop %v376
      %v389 = vmul.f32 1.0, %v388
      %v390 = vrcp.pop %v377
      %v391 = vmul.f32 1.0, %v390
      %v392 = vrcp.pop %v378
      %v393 = vmul.f32 1.0, %v392
      %v394 = vrcp.pop %v379
      %v395 = vmul.f32 1.0, %v394
      %v396 = vmul.f32 %v340, %v381
      %v397 = vmul.f32 %v341, %v383
      %v398 = vmul.f32 %v342, %v385
      %v399 = vmul.f32 %v343, %v387
      %v400 = vmul.f32 %v344, %v389
      %v401 = vmul.f32 %v345, %v391
      %v402 = vmul.f32 %v346, %v393
      %v403 = vmul.f32 %v347, %v395
      %404 = vst [vmem:[%s177] sm:$0xff] %v396
      %405 = vst [vmem:[%s177 + $0x8] sm:$0xff] %v397
      %406 = vst [vmem:[%s177 + $0x20] sm:$0xff] %v398
      %407 = vst [vmem:[%s177 + $0x28] sm:$0xff] %v399
      %408 = vst [vmem:[%s177 + $0x40] sm:$0xff] %v400
      %409 = vst [vmem:[%s177 + $0x48] sm:$0xff] %v401
      %410 = vst [vmem:[%s177 + $0x60] sm:$0xff] %v402
      %411 = vst [vmem:[%s177 + $0x68] sm:$0xff] %v403
      %v412 = vld [vmem:[%s2 + $0x1] sm:$0x1]
      %v414 = vlaneseq
      %v415 = vshrl.u32 %v414, 7
      %v416 = vsub.s32 0, %v415
      %v417 = vrot.slane %v412, %v416
      %v419 = vadd.f32 %v289, %v417
      %v420 = vadd.f32 %v295, %v417
      %v421 = vadd.f32 %v301, %v417
      %v422 = vadd.f32 %v307, %v417
      %v423 = vadd.f32 %v313, %v417
      %v424 = vadd.f32 %v319, %v417
      %v425 = vadd.f32 %v325, %v417
      %v426 = vadd.f32 %v331, %v417
      %v427 = vxor.u32 %v419, 2147483648
      %v428 = vxor.u32 %v420, 2147483648
      %v429 = vxor.u32 %v421, 2147483648
      %v430 = vxor.u32 %v422, 2147483648
      %v431 = vxor.u32 %v423, 2147483648
      %v432 = vxor.u32 %v424, 2147483648
      %v433 = vxor.u32 %v425, 2147483648
      %v434 = vxor.u32 %v426, 2147483648
      %v435 = vmul.f32 %v427, 1.442695
      %v436 = vpow.pop %v435
      %v437 = vmul.f32 %v428, 1.442695
      %v438 = vpow.pop %v437
      %v439 = vmul.f32 %v429, 1.442695
      %v440 = vpow.pop %v439
      %v441 = vmul.f32 %v430, 1.442695
      %v442 = vpow.pop %v441
      %v443 = vmul.f32 %v431, 1.442695
      %v444 = vpow.pop %v443
      %v445 = vmul.f32 %v432, 1.442695
      %v446 = vpow.pop %v445
      %v447 = vmul.f32 %v433, 1.442695
      %v448 = vpow.pop %v447
      %v449 = vmul.f32 %v434, 1.442695
      %v450 = vpow.pop %v449
      %v451 = vadd.f32 %v436, 1.0
      %v452 = vadd.f32 %v438, 1.0
      %v453 = vadd.f32 %v440, 1.0
      %v454 = vadd.f32 %v442, 1.0
      %v455 = vadd.f32 %v444, 1.0
      %v456 = vadd.f32 %v446, 1.0
      %v457 = vadd.f32 %v448, 1.0
      %v458 = vadd.f32 %v450, 1.0
      %v459 = vrcp.pop %v451
      %v460 = vmul.f32 1.0, %v459
      %v461 = vrcp.pop %v452
      %v462 = vmul.f32 1.0, %v461
      %v463 = vrcp.pop %v453
      %v464 = vmul.f32 1.0, %v463
      %v465 = vrcp.pop %v454
      %v466 = vmul.f32 1.0, %v465
      %v467 = vrcp.pop %v455
      %v468 = vmul.f32 1.0, %v467
      %v469 = vrcp.pop %v456
      %v470 = vmul.f32 1.0, %v469
      %v471 = vrcp.pop %v457
      %v472 = vmul.f32 1.0, %v471
      %v473 = vrcp.pop %v458
      %v474 = vmul.f32 1.0, %v473
      %v475 = vmul.f32 %v419, %v460
      %v476 = vmul.f32 %v420, %v462
      %v477 = vmul.f32 %v421, %v464
      %v478 = vmul.f32 %v422, %v466
      %v479 = vmul.f32 %v423, %v468
      %v480 = vmul.f32 %v424, %v470
      %v481 = vmul.f32 %v425, %v472
      %v482 = vmul.f32 %v426, %v474
      %s483 = scalar_lea.vmem %s177, 16
      %484 = vst [vmem:[%s483] sm:$0xff] %v475
      %485 = vst [vmem:[%s483 + $0x8] sm:$0xff] %v476
      %486 = vst [vmem:[%s483 + $0x20] sm:$0xff] %v477
      %487 = vst [vmem:[%s483 + $0x28] sm:$0xff] %v478
      %488 = vst [vmem:[%s483 + $0x40] sm:$0xff] %v479
      %489 = vst [vmem:[%s483 + $0x48] sm:$0xff] %v480
      %490 = vst [vmem:[%s483 + $0x60] sm:$0xff] %v481
      %491 = vst [vmem:[%s483 + $0x68] sm:$0xff] %v482
      %s492 = smul.u32 4, %s14
      %p493 = scmp.lt.s32.totalorder %s492, 31
      %s494 = scalar_select %p493, %s492, 31
      %s495 = smul.addr %s494, 4
      %s496 = smul.addr %s495, 8
      %s497 = scalar_lea.vmem %s3, %s496
      // Predicated region
      $region33: #{conv_transpose_bn_silu.1} parent=31 // pred_check
        %p498 = pneg %p100
      $region34: #{conv_transpose_bn_silu.1} parent=31 // pred_check_branch
        %500 = sbr.rel (%p498) target = $region36
      $region35: #{conv_transpose_bn_silu.1} parent=31 // pred_region
        %s501 = smul.u32 4, %s14
      $region36: #{conv_transpose_bn_silu.1} parent=31 // pred_fallthru
        _
    $region32: #{conv_transpose_bn_silu.1} parent=5 // pred_fallthru
      _
    %p502 = scmp.le.s32.totalorder 2, %s9
    // Predicated region
    $region37: #{conv_transpose_bn_silu.1} parent=5 // pred_check
      %p503 = pneg %p502
    $region38: #{conv_transpose_bn_silu.1} parent=5 // pred_check_branch
      %505 = sbr.rel (%p503) target = $region40
    $region39: #{conv_transpose_bn_silu.1} parent=5 // pred_region
      %s506 = ssub.s32 %s9, 2
      // Predicated region
      $region41: #{conv_transpose_bn_silu.1} parent=39 // pred_check
        %p507 = pneg %p106
      $region42: #{conv_transpose_bn_silu.1} parent=39 // pred_check_branch
        %509 = sbr.rel (%p507) target = $region44
      $region43: #{conv_transpose_bn_silu.1} parent=39 // pred_region
        %s510 = smul.u32 4, %s15
        %p511 = scmp.lt.s32.totalorder %s510, 31
        %s512 = scalar_select %p511, %s510, 31
        %s513 = smul.addr %s512, 4
        %s514 = smul.addr %s513, 8
        %s515 = scalar_lea.vmem %s3, %s514
      $region44: #{conv_transpose_bn_silu.1} parent=39 // pred_fallthru
        _
    $region40: #{conv_transpose_bn_silu.1} parent=5 // pred_fallthru
      _
  $region6: #{conv_transpose_bn_silu.1} parent=0 // loop_footer
    %s13 = sadd.s32 1, %s9
  $region7: #{conv_transpose_bn_silu.1} parent=0 // loop_footer_branch
    %8 = sbr.rel target = $region3
  $region8: #{conv_transpose_bn_silu.1} parent=0 // loop_exit
    _

</llo_original>
